<compile_context>
chip_gen: v7x
topology: tpu7x:2x2x1
jax: 0.10.0
libtpu: 0.0.40
codegen_flags: <defaults>
</compile_context>

<pallas_src>
import jax
import jax.numpy as jnp
from jax.experimental import pallas as pl
from jax.experimental.pallas import tpu as pltpu


def _round_up(n, m):
    return ((n + m - 1) // m) * m


def ffn_kernel(x_ref, w1_ref, b1_ref, w2_ref, b2_ref, o_ref, acc_ref):
    # grid = (row tiles, hidden tiles); hidden axis is the reduction axis.
    k = pl.program_id(1)

    @pl.when(k == 0)
    def _():
        acc_ref[...] = jnp.zeros_like(acc_ref)

    # First matmul on the MXU (bf16 in, f32 accumulate); bias + ReLU in f32.
    # b1 tile corresponds to this hidden slice, so adding it per K-step is correct.
    h = jnp.dot(x_ref[...], w1_ref[...], preferred_element_type=jnp.float32)
    h = jnp.maximum(h + b1_ref[...], 0.0)

    # Second matmul, accumulated in the f32 scratch across hidden tiles.
    acc_ref[...] += jnp.dot(
        h.astype(jnp.bfloat16), w2_ref[...], preferred_element_type=jnp.float32
    )

    @pl.when(k == pl.num_programs(1) - 1)
    def _():
        # b2 spans the output (E) dim -> add exactly once, at finalize.
        o_ref[...] = (acc_ref[...] + b2_ref[...]).astype(o_ref.dtype)


def feedforward(x, w1, b1, w2, b2, *, tm=256, tk=512):
    """x: (B, T, E). w1: (E, H), b1: (H,), w2: (H, E), b2: (E,)."""
    B, T, E = x.shape
    H = w1.shape[1]
    M = B * T

    # Lane-dense / MXU-friendly padding.
    E_p = _round_up(E, 128)
    tm = min(tm, _round_up(M, 128))          # don't over-pad tiny inputs
    tk = min(tk, _round_up(H, 128))
    M_p = _round_up(M, tm)
    H_p = _round_up(H, tk)

    # Zero-pad so padded hidden units and padded output columns contribute 0.
    x2d = jnp.pad(x.reshape(M, E), ((0, M_p - M), (0, E_p - E))).astype(jnp.bfloat16)
    w1_p = jnp.pad(w1, ((0, E_p - E), (0, H_p - H))).astype(jnp.bfloat16)
    w2_p = jnp.pad(w2, ((0, H_p - H), (0, E_p - E))).astype(jnp.bfloat16)
    b1_p = jnp.pad(b1, (0, H_p - H)).astype(jnp.float32).reshape(1, H_p)
    b2_p = jnp.pad(b2, (0, E_p - E)).astype(jnp.float32).reshape(1, E_p)

    out2d = pl.pallas_call(
        ffn_kernel,
        out_shape=jax.ShapeDtypeStruct((M_p, E_p), x.dtype),
        grid_spec=pltpu.PrefetchScalarGridSpec(
            num_scalar_prefetch=0,
            grid=(M_p // tm, H_p // tk),
            in_specs=[
                pl.BlockSpec((tm, E_p), lambda i, k: (i, 0)),   # x rows (resident over K)
                pl.BlockSpec((E_p, tk), lambda i, k: (0, k)),   # W1 hidden slice
                pl.BlockSpec((1, tk), lambda i, k: (0, k)),     # b1 hidden slice
                pl.BlockSpec((tk, E_p), lambda i, k: (k, 0)),   # W2 hidden slice
                pl.BlockSpec((1, E_p), lambda i, k: (0, 0)),    # b2 (constant)
            ],
            out_specs=pl.BlockSpec((tm, E_p), lambda i, k: (i, 0)),
            scratch_shapes=[pltpu.VMEM((tm, E_p), jnp.float32)],
        ),
        compiler_params=pltpu.CompilerParams(
            dimension_semantics=("parallel", "arbitrary"),
            vmem_limit_bytes=64 * 1024 * 1024,
        ),
    )(x2d, w1_p, b1_p, w2_p, b2_p)
    return out2d[:M, :E].reshape(B, T, E)


def init_params(key, emb_dim, ff_dim):
    """Deterministic init matching nn.Linear shapes (uniform +-1/sqrt(fan_in))."""
    hidden = emb_dim * ff_dim
    k1, k2, k3, k4 = jax.random.split(key, 4)
    bound1 = 1.0 / jnp.sqrt(emb_dim)
    bound2 = 1.0 / jnp.sqrt(hidden)
    # stored transposed relative to PyTorch ((in, out) instead of (out, in))
    w1 = jax.random.uniform(k1, (emb_dim, hidden), jnp.float32, -bound1, bound1)
    b1 = jax.random.uniform(k2, (hidden,), jnp.float32, -bound1, bound1)
    w2 = jax.random.uniform(k3, (hidden, emb_dim), jnp.float32, -bound2, bound2)
    b2 = jax.random.uniform(k4, (emb_dim,), jnp.float32, -bound2, bound2)
    return w1, b1, w2, b2


if __name__ == "__main__":
    emb_dim, ff_dim = 32, 4          # hidden = 128
    batch, seq = 2, 8                # M = 16 rows
    key = jax.random.PRNGKey(0)
    kx, kp = jax.random.split(key)
    x = jax.random.normal(kx, (batch, seq, emb_dim), jnp.float32)
    w1, b1, w2, b2 = init_params(kp, emb_dim, ff_dim)

    y = feedforward(x, w1, b1, w2, b2)
    jax.block_until_ready(y)

    # Precision-matched reference (bf16 matmul inputs, f32 accumulation).
    xb = x.reshape(-1, emb_dim).astype(jnp.bfloat16)
    h = jnp.maximum(
        jnp.dot(xb, w1.astype(jnp.bfloat16), preferred_element_type=jnp.float32) + b1,
        0.0,
    )
    ref = jnp.dot(
        h.astype(jnp.bfloat16), w2.astype(jnp.bfloat16),
        preferred_element_type=jnp.float32,
    ) + b2
    ref = ref.reshape(batch, seq, emb_dim)
    assert jnp.allclose(y, ref, atol=1e-2, rtol=1e-2), "mismatch vs reference"

    # Loose sanity check against the full-f32 reference as well.
    ref32 = jnp.maximum(x.reshape(-1, emb_dim) @ w1 + b1, 0.0) @ w2 + b2
    ref32 = ref32.reshape(batch, seq, emb_dim)
    assert jnp.allclose(y, ref32, atol=1e-1, rtol=1e-1), "bf16 drift too large"

    print("KERNEL_OK")
</pallas_src>

<mosaic_0001>
module attributes {stable_mosaic.version = 11 : i64} {
  func.func @ffn_kernel(%arg0: i32, %arg1: i32, %arg2: memref<128x128xbf16, #tpu.memory_space<vmem>>, %arg3: memref<128x128xbf16, #tpu.memory_space<vmem>>, %arg4: memref<1x128xf32, #tpu.memory_space<vmem>>, %arg5: memref<128x128xbf16, #tpu.memory_space<vmem>>, %arg6: memref<1x128xf32, #tpu.memory_space<vmem>>, %arg7: memref<128x128xf32, #tpu.memory_space<vmem>>, %arg8: memref<128x128xf32, #tpu.memory_space<vmem>>) attributes {dimension_semantics = [#tpu.dimension_semantics<parallel>, #tpu.dimension_semantics<arbitrary>], iteration_bounds = array<i64: 1, 1>, scalar_prefetch = 0 : i64, scratch_operands = 1 : i64, tpu.core_type = #tpu.core_type<tc>, window_params = [{transform_indices = @transform_0, window_bounds = array<i64: 128, 128>}, {transform_indices = @transform_1, window_bounds = array<i64: 128, 128>}, {transform_indices = @transform_2, window_bounds = array<i64: 1, 128>}, {transform_indices = @transform_3, window_bounds = array<i64: 128, 128>}, {pipeline_mode = #tpu.pipeline_mode<synchronous>, transform_indices = @transform_4, window_bounds = array<i64: 1, 128>}, {transform_indices = @transform_5, window_bounds = array<i64: 128, 128>}]} {
    %c0_i32 = arith.constant 0 : i32
    %0 = arith.cmpi eq, %arg1, %c0_i32 : i32
    %1 = arith.extui %0 : i1 to i32
    %c0_i32_0 = arith.constant 0 : i32
    %2 = arith.cmpi ne, %1, %c0_i32_0 : i32
    scf.if %2 {
      %cst_16 = arith.constant 0.000000e+00 : f32
      %20 = vector.broadcast %cst_16 : f32 to vector<128x128xf32>
      %c0_17 = arith.constant 0 : index
      %c0_18 = arith.constant 0 : index
      %21 = vector.load %arg8[%c0_17, %c0_18] : memref<128x128xf32, #tpu.memory_space<vmem>>, vector<128x128xf32>
      tpu.vector_store %arg8[%c0_17, %c0_18], %20 {strides = array<i32>} : memref<128x128xf32, #tpu.memory_space<vmem>>, vector<128x128xf32>,
    } else {
    }
    %c0 = arith.constant 0 : index
    %c0_1 = arith.constant 0 : index
    %3 = vector.load %arg2[%c0, %c0_1] : memref<128x128xbf16, #tpu.memory_space<vmem>>, vector<128x128xbf16>
    %c0_2 = arith.constant 0 : index
    %c0_3 = arith.constant 0 : index
    %4 = vector.load %arg3[%c0_2, %c0_3] : memref<128x128xbf16, #tpu.memory_space<vmem>>, vector<128x128xbf16>
    %cst = arith.constant dense<0.000000e+00> : vector<128x128xf32>
    %5 = tpu.matmul %3, %4, %cst {dimension_numbers = #tpu.dot_dimension_numbers<[1], [0], [0], [1], [0, 0, 1, 1], [], []>} : vector<128x128xbf16>, vector<128x128xbf16>, vector<128x128xf32> -> vector<128x128xf32>
    %c0_4 = arith.constant 0 : index
    %c0_5 = arith.constant 0 : index
    %6 = vector.load %arg4[%c0_4, %c0_5] : memref<1x128xf32, #tpu.memory_space<vmem>>, vector<1x128xf32>
    %7 = vector.broadcast %6 : vector<1x128xf32> to vector<128x128xf32>
    %8 = arith.addf %5, %7 : vector<128x128xf32>
    %cst_6 = arith.constant 0.000000e+00 : f32
    %9 = vector.broadcast %cst_6 : f32 to vector<128x128xf32>
    %10 = arith.maximumf %8, %9 : vector<128x128xf32>
    %c0_7 = arith.constant 0 : index
    %c0_8 = arith.constant 0 : index
    %11 = vector.load %arg8[%c0_7, %c0_8] : memref<128x128xf32, #tpu.memory_space<vmem>>, vector<128x128xf32>
    %12 = arith.truncf %10 : vector<128x128xf32> to vector<128x128xbf16>
    %c0_9 = arith.constant 0 : index
    %c0_10 = arith.constant 0 : index
    %13 = vector.load %arg5[%c0_9, %c0_10] : memref<128x128xbf16, #tpu.memory_space<vmem>>, vector<128x128xbf16>
    %cst_11 = arith.constant dense<0.000000e+00> : vector<128x128xf32>
    %14 = tpu.matmul %12, %13, %cst_11 {dimension_numbers = #tpu.dot_dimension_numbers<[1], [0], [0], [1], [0, 0, 1, 1], [], []>} : vector<128x128xbf16>, vector<128x128xbf16>, vector<128x128xf32> -> vector<128x128xf32>
    %15 = arith.addf %11, %14 : vector<128x128xf32>
    %c0_12 = arith.constant 0 : index
    %c0_13 = arith.constant 0 : index
    %16 = vector.load %arg8[%c0_12, %c0_13] : memref<128x128xf32, #tpu.memory_space<vmem>>, vector<128x128xf32>
    tpu.vector_store %arg8[%c0_12, %c0_13], %15 {strides = array<i32>} : memref<128x128xf32, #tpu.memory_space<vmem>>, vector<128x128xf32>,
    %c0_i32_14 = arith.constant 0 : i32
    %17 = arith.cmpi eq, %arg1, %c0_i32_14 : i32
    %18 = arith.extui %17 : i1 to i32
    %c0_i32_15 = arith.constant 0 : i32
    %19 = arith.cmpi ne, %18, %c0_i32_15 : i32
    scf.if %19 {
      %c0_16 = arith.constant 0 : index
      %c0_17 = arith.constant 0 : index
      %20 = vector.load %arg8[%c0_16, %c0_17] : memref<128x128xf32, #tpu.memory_space<vmem>>, vector<128x128xf32>
      %c0_18 = arith.constant 0 : index
      %c0_19 = arith.constant 0 : index
      %21 = vector.load %arg6[%c0_18, %c0_19] : memref<1x128xf32, #tpu.memory_space<vmem>>, vector<1x128xf32>
      %22 = vector.broadcast %21 : vector<1x128xf32> to vector<128x128xf32>
      %23 = arith.addf %20, %22 : vector<128x128xf32>
      %c0_20 = arith.constant 0 : index
      %c0_21 = arith.constant 0 : index
      %24 = vector.load %arg7[%c0_20, %c0_21] : memref<128x128xf32, #tpu.memory_space<vmem>>, vector<128x128xf32>
      tpu.vector_store %arg7[%c0_20, %c0_21], %23 {strides = array<i32>} : memref<128x128xf32, #tpu.memory_space<vmem>>, vector<128x128xf32>,
    } else {
    }
    return
  }
  func.func @transform_0(%arg0: i32, %arg1: i32) -> (i32, i32) {
    %c0_i32 = arith.constant 0 : i32
    %c0_i32_0 = arith.constant 0 : i32
    return %arg0, %c0_i32 : i32, i32
  }
  func.func @transform_1(%arg0: i32, %arg1: i32) -> (i32, i32) {
    %c0_i32 = arith.constant 0 : i32
    %c0_i32_0 = arith.constant 0 : i32
    return %c0_i32, %arg1 : i32, i32
  }
  func.func @transform_2(%arg0: i32, %arg1: i32) -> (i32, i32) {
    %c0_i32 = arith.constant 0 : i32
    %c0_i32_0 = arith.constant 0 : i32
    return %c0_i32, %arg1 : i32, i32
  }
  func.func @transform_3(%arg0: i32, %arg1: i32) -> (i32, i32) {
    %c0_i32 = arith.constant 0 : i32
    %c0_i32_0 = arith.constant 0 : i32
    return %arg1, %c0_i32 : i32, i32
  }
  func.func @transform_4(%arg0: i32, %arg1: i32) -> (i32, i32) {
    %c0_i32 = arith.constant 0 : i32
    %c0_i32_0 = arith.constant 0 : i32
    %c0_i32_1 = arith.constant 0 : i32
    return %c0_i32, %c0_i32_0 : i32, i32
  }
  func.func @transform_5(%arg0: i32, %arg1: i32) -> (i32, i32) {
    %c0_i32 = arith.constant 0 : i32
    %c0_i32_0 = arith.constant 0 : i32
    return %arg0, %c0_i32 : i32, i32
  }
}

</mosaic_0001>

<llo_original>
// kernel: tpu_custom_call.1
$region0: #{tpu_custom_call.1}
  #allocation0 [shape = 'u32[]', space=smem, size = 0x4, offset = 0x4, fixed_abs, tag = 'smem constant byte address 0x4 - core index']
  #allocation1 [shape = 'u32[144,128]{1,0:T(1,128)}', space=vmem, size = 0x12000, scoped, tag = 'internal scratch']
  #allocation2 [shape = 'f32[128,128]{1,0:T(8,128)}', space=vmem, size = 0x10000, scoped, tag = 'scratch operand']
  %s0 = inlined_call_operand.hbm [shape: bf16[128,128], index: 0, kind: input, shape index: {}]
  %s1 = inlined_call_operand.hbm [shape: bf16[128,128], index: 1, kind: input, shape index: {}]
  %s2 = inlined_call_operand.hbm [shape: f32[1,128], index: 2, kind: input, shape index: {}]
  %s3 = inlined_call_operand.hbm [shape: bf16[128,128], index: 3, kind: input, shape index: {}]
  %s4 = inlined_call_operand.hbm [shape: f32[1,128], index: 4, kind: input, shape index: {}]
  %s5 = inlined_call_operand.hbm [shape: f32[128,128], index: 5, kind: output, shape index: {}]
  %s6 = sld [smem:[#allocation0]]
  $region58: #{tpu_custom_call.1} parent=0
    _
  %s8 = ssub.s32 1, %s6
  %s9 = scalar_select 0, %s8, %s6
  $region1: #{tpu_custom_call.1} parent=0
    #allocation3 [shape = 'u8[32768]{0}', space=vmem, size = 0x8000, scoped, tag = 'input window, operand 0, single buffered']
    #allocation4 [shape = 's32[1]{0}', space=sflag, size = 0x4, scoped, tag = 'scoped memory for tpu_custom_call.1']
    #allocation5 [shape = 's32[1]{0}', space=sflag, size = 0x4, scoped, tag = 'scoped memory for tpu_custom_call.1']
    #allocation6 [shape = 'u8[32768]{0}', space=vmem, size = 0x8000, scoped, tag = 'input window, operand 1, single buffered']
    #allocation7 [shape = 's32[1]{0}', space=sflag, size = 0x4, scoped, tag = 'scoped memory for tpu_custom_call.1']
    #allocation8 [shape = 'u8[512]{0}', space=vmem, size = 0x400, scoped, tag = 'input window, operand 2, single buffered']
    #allocation9 [shape = 'u8[32768]{0}', space=vmem, size = 0x8000, scoped, tag = 'input window, operand 3, single buffered']
    #allocation10 [shape = 's32[1]{0}', space=sflag, size = 0x4, scoped, tag = 'scoped memory for tpu_custom_call.1']
    #allocation11 [shape = 'u8[512]{0}', space=vmem, size = 0x400, scoped, tag = 'input window, operand 4, single buffered']
    #allocation12 [shape = 'u8[65536]{0}', space=vmem, size = 0x10000, scoped, tag = 'output window, operand 0, single buffered']
    %10 = vsyncpa [#allocation4], 0
    %11 = vsyncpa [#allocation7], 0
    %12 = vsyncpa [#allocation10], 0
    %13 = vsyncpa [#allocation5], 0
    // Predicated region
    $region2: #{tpu_custom_call.1} parent=1 // pred_check
      _
    $region3: #{tpu_custom_call.1} parent=1 // pred_check_branch
      %15 = sbr.rel (0) target = $region5
    $region4: #{tpu_custom_call.1} parent=1 // pred_region
      %s17 = ssub.s32 1024, 1024
      %18 = vsyncadd [#allocation4], %s17
      %s19 = sshll.u32 [#allocation3], 4
      %s20 = int_to_ptr.vmem [resolvable:$true] %s19
      %25 = dma.hbm_to_vmem [thread:$0]  %s0, 1024, %s20, [#allocation4], 64, 64, 4
    $region5: #{tpu_custom_call.1} parent=1 // pred_fallthru
      _
    // Predicated region
    $region6: #{tpu_custom_call.1} parent=1 // pred_check
      _
    $region7: #{tpu_custom_call.1} parent=1 // pred_check_branch
      %27 = sbr.rel (0) target = $region9
    $region8: #{tpu_custom_call.1} parent=1 // pred_region
      %s29 = ssub.s32 1024, 1024
      %30 = vsyncadd [#allocation7], %s29
      %s31 = sshll.u32 [#allocation6], 4
      %s32 = int_to_ptr.vmem [resolvable:$true] %s31
      %37 = dma.hbm_to_vmem [thread:$0]  %s1, 1024, %s32, [#allocation7], 64, 64, 4
    $region9: #{tpu_custom_call.1} parent=1 // pred_fallthru
      _
    // Predicated region
    $region10: #{tpu_custom_call.1} parent=1 // pred_check
      _
    $region11: #{tpu_custom_call.1} parent=1 // pred_check_branch
      %39 = sbr.rel (0) target = $region13
    $region12: #{tpu_custom_call.1} parent=1 // pred_region
      %s41 = ssub.s32 16, 16
      %42 = vsyncadd [#allocation7], %s41
      %s44 = sshll.u32 [#allocation8], 4
      %s45 = int_to_ptr.vmem [resolvable:$true] %s44
      %47 = dma.hbm_to_vmem [thread:$0]  %s2, 16, %s45, [#allocation7]
    $region13: #{tpu_custom_call.1} parent=1 // pred_fallthru
      _
    // Predicated region
    $region14: #{tpu_custom_call.1} parent=1 // pred_check
      _
    $region15: #{tpu_custom_call.1} parent=1 // pred_check_branch
      %49 = sbr.rel (0) target = $region17
    $region16: #{tpu_custom_call.1} parent=1 // pred_region
      %s51 = ssub.s32 1024, 1024
      %52 = vsyncadd [#allocation10], %s51
      %s53 = sshll.u32 [#allocation9], 4
      %s54 = int_to_ptr.vmem [resolvable:$true] %s53
      %59 = dma.hbm_to_vmem [thread:$0]  %s3, 1024, %s54, [#allocation10], 64, 64, 4
    $region17: #{tpu_custom_call.1} parent=1 // pred_fallthru
      _
    // Predicated region
    $region18: #{tpu_custom_call.1} parent=1 // pred_check
      _
    $region19: #{tpu_custom_call.1} parent=1 // pred_check_branch
      %61 = sbr.rel (0) target = $region21
    $region20: #{tpu_custom_call.1} parent=1 // pred_region
      %s63 = ssub.s32 16, 16
      %64 = vsyncadd [#allocation10], %s63
      %s66 = sshll.u32 [#allocation11], 4
      %s67 = int_to_ptr.vmem [resolvable:$true] %s66
      %69 = dma.hbm_to_vmem [thread:$0]  %s4, 16, %s67, [#allocation10]
    $region21: #{tpu_custom_call.1} parent=1 // pred_fallthru
      _
    // Predicated region
    $region22: #{tpu_custom_call.1} parent=1 // pred_check
      _
    $region23: #{tpu_custom_call.1} parent=1 // pred_check_branch
      %71 = sbr.rel (0) target = $region25
    $region24: #{tpu_custom_call.1} parent=1 // pred_region
      %72 = dma.done [#allocation4], 1024
    $region25: #{tpu_custom_call.1} parent=1 // pred_fallthru
      _
    // Predicated region
    $region26: #{tpu_custom_call.1} parent=1 // pred_check
      _
    $region27: #{tpu_custom_call.1} parent=1 // pred_check_branch
      %74 = sbr.rel (0) target = $region29
    $region28: #{tpu_custom_call.1} parent=1 // pred_region
      %75 = dma.done [#allocation7], 1024
    $region29: #{tpu_custom_call.1} parent=1 // pred_fallthru
      _
    // Predicated region
    $region30: #{tpu_custom_call.1} parent=1 // pred_check
      _
    $region31: #{tpu_custom_call.1} parent=1 // pred_check_branch
      %77 = sbr.rel (0) target = $region33
    $region32: #{tpu_custom_call.1} parent=1 // pred_region
      %78 = dma.done [#allocation7], 16
    $region33: #{tpu_custom_call.1} parent=1 // pred_fallthru
      _
    // Predicated region
    $region34: #{tpu_custom_call.1} parent=1 // pred_check
      _
    $region35: #{tpu_custom_call.1} parent=1 // pred_check_branch
      %80 = sbr.rel (0) target = $region37
    $region36: #{tpu_custom_call.1} parent=1 // pred_region
      %81 = dma.done [#allocation10], 1024
    $region37: #{tpu_custom_call.1} parent=1 // pred_fallthru
      _
    // Predicated region
    $region38: #{tpu_custom_call.1} parent=1 // pred_check
      _
    $region39: #{tpu_custom_call.1} parent=1 // pred_check_branch
      %83 = sbr.rel (0) target = $region41
    $region40: #{tpu_custom_call.1} parent=1 // pred_region
      %84 = dma.done [#allocation10], 16
    $region41: #{tpu_custom_call.1} parent=1 // pred_fallthru
      _
    %p86 = scmp.eq.s32.totalorder 0, 0
    // Predicated region
    $region42: #{tpu_custom_call.1} parent=1 // pred_check
      %p87 = pneg %p86
    $region43: #{tpu_custom_call.1} parent=1 // pred_check_branch
      %89 = sbr.rel (%p87) target = $region45
    $region44: #{tpu_custom_call.1} parent=1 // pred_region
      %90 = vst [vmem:[#allocation2] sm:$0xff] 0.0
      %91 = vst [vmem:[#allocation2 + $0x8] sm:$0xff] 0.0
      %92 = vst [vmem:[#allocation2 + $0x10] sm:$0xff] 0.0
      %93 = vst [vmem:[#allocation2 + $0x18] sm:$0xff] 0.0
      %94 = vst [vmem:[#allocation2 + $0x20] sm:$0xff] 0.0
      %95 = vst [vmem:[#allocation2 + $0x28] sm:$0xff] 0.0
      %96 = vst [vmem:[#allocation2 + $0x30] sm:$0xff] 0.0
      %97 = vst [vmem:[#allocation2 + $0x38] sm:$0xff] 0.0
      %98 = vst [vmem:[#allocation2 + $0x40] sm:$0xff] 0.0
      %99 = vst [vmem:[#allocation2 + $0x48] sm:$0xff] 0.0
      %100 = vst [vmem:[#allocation2 + $0x50] sm:$0xff] 0.0
      %101 = vst [vmem:[#allocation2 + $0x58] sm:$0xff] 0.0
      %102 = vst [vmem:[#allocation2 + $0x60] sm:$0xff] 0.0
      %103 = vst [vmem:[#allocation2 + $0x68] sm:$0xff] 0.0
      %104 = vst [vmem:[#allocation2 + $0x70] sm:$0xff] 0.0
      %105 = vst [vmem:[#allocation2 + $0x78] sm:$0xff] 0.0
    $region45: #{tpu_custom_call.1} parent=1 // pred_fallthru
      _
    %v106 = vld [vmem:[#allocation3] sm:$0xf]
    %v107 = vld [vmem:[#allocation3 + $0x4] sm:$0xf]
    %v108 = vld [vmem:[#allocation3 + $0x8] sm:$0xf]
    %v109 = vld [vmem:[#allocation3 + $0xc] sm:$0xf]
    %v110 = vld [vmem:[#allocation3 + $0x10] sm:$0xf]
    %v111 = vld [vmem:[#allocation3 + $0x14] sm:$0xf]
    %v112 = vld [vmem:[#allocation3 + $0x18] sm:$0xf]
    %v113 = vld [vmem:[#allocation3 + $0x1c] sm:$0xf]
    %v114 = vld [vmem:[#allocation3 + $0x20] sm:$0xf]
    %v115 = vld [vmem:[#allocation3 + $0x24] sm:$0xf]
    %v116 = vld [vmem:[#allocation3 + $0x28] sm:$0xf]
    %v117 = vld [vmem:[#allocation3 + $0x2c] sm:$0xf]
    %v118 = vld [vmem:[#allocation3 + $0x30] sm:$0xf]
    %v119 = vld [vmem:[#allocation3 + $0x34] sm:$0xf]
    %v120 = vld [vmem:[#allocation3 + $0x38] sm:$0xf]
    %v121 = vld [vmem:[#allocation3 + $0x3c] sm:$0xf]
    %v122 = vld [vmem:[#allocation6] sm:$0xf]
    %v123 = vld [vmem:[#allocation6 + $0x4] sm:$0xf]
    %v124 = vld [vmem:[#allocation6 + $0x8] sm:$0xf]
    %v125 = vld [vmem:[#allocation6 + $0xc] sm:$0xf]
    %v126 = vld [vmem:[#allocation6 + $0x10] sm:$0xf]
    %v127 = vld [vmem:[#allocation6 + $0x14] sm:$0xf]
    %v128 = vld [vmem:[#allocation6 + $0x18] sm:$0xf]
    %v129 = vld [vmem:[#allocation6 + $0x1c] sm:$0xf]
    %v130 = vld [vmem:[#allocation6 + $0x20] sm:$0xf]
    %v131 = vld [vmem:[#allocation6 + $0x24] sm:$0xf]
    %v132 = vld [vmem:[#allocation6 + $0x28] sm:$0xf]
    %v133 = vld [vmem:[#allocation6 + $0x2c] sm:$0xf]
    %v134 = vld [vmem:[#allocation6 + $0x30] sm:$0xf]
    %v135 = vld [vmem:[#allocation6 + $0x34] sm:$0xf]
    %v136 = vld [vmem:[#allocation6 + $0x38] sm:$0xf]
    %v137 = vld [vmem:[#allocation6 + $0x3c] sm:$0xf]
    %v138 = vld [vmem:[#allocation8] sm:$0x1]
    %v140 = vlaneseq
    %v141 = vshrl.u32 %v140, 7
    %v142 = vsub.s32 0, %v141
    %v143 = vrot.slane %v138, %v142
    %v161 = vunpack.c.l.b16 %v106
    %v162 = vunpack.c.l.b16 %v107
    %v163 = vunpack.c.l.b16 %v108
    %v164 = vunpack.c.l.b16 %v109
    %v165 = vunpack.c.l.b16 %v110
    %v166 = vunpack.c.l.b16 %v111
    %v167 = vunpack.c.l.b16 %v112
    %v168 = vunpack.c.l.b16 %v113
    %v169 = vunpack.c.l.b16 %v114
    %v170 = vunpack.c.l.b16 %v115
    %v171 = vunpack.c.l.b16 %v116
    %v172 = vunpack.c.l.b16 %v117
    %v173 = vunpack.c.l.b16 %v118
    %v174 = vunpack.c.l.b16 %v119
    %v175 = vunpack.c.l.b16 %v120
    %v176 = vunpack.c.l.b16 %v121
    %v177 = vpack.c.b16 %v162, %v161
    %v178 = vpack.c.b16 %v164, %v163
    %v179 = vpack.c.b16 %v166, %v165
    %v180 = vpack.c.b16 %v168, %v167
    %v181 = vpack.c.b16 %v170, %v169
    %v182 = vpack.c.b16 %v172, %v171
    %v183 = vpack.c.b16 %v174, %v173
    %v184 = vpack.c.b16 %v176, %v175
    %v209 = vunpack.c.l.b16 %v122
    %v210 = vunpack.c.l.b16 %v123
    %v211 = vunpack.c.l.b16 %v124
    %v212 = vunpack.c.l.b16 %v125
    %v213 = vunpack.c.l.b16 %v126
    %v214 = vunpack.c.l.b16 %v127
    %v215 = vunpack.c.l.b16 %v128
    %v216 = vunpack.c.l.b16 %v129
    %v217 = vunpack.c.l.b16 %v130
    %v218 = vunpack.c.l.b16 %v131
    %v219 = vunpack.c.l.b16 %v132
    %v220 = vunpack.c.l.b16 %v133
    %v221 = vunpack.c.l.b16 %v134
    %v222 = vunpack.c.l.b16 %v135
    %v223 = vunpack.c.l.b16 %v136
    %v224 = vunpack.c.l.b16 %v137
    %v225 = vpack.c.b16 %v210, %v209
    %v226 = vpack.c.b16 %v212, %v211
    %v227 = vpack.c.b16 %v214, %v213
    %v228 = vpack.c.b16 %v216, %v215
    %v229 = vpack.c.b16 %v218, %v217
    %v230 = vpack.c.b16 %v220, %v219
    %v231 = vpack.c.b16 %v222, %v221
    %v232 = vpack.c.b16 %v224, %v223
    %241 = vmatprep.subr.bf16.mxu0 0
    %242 = vmatpush1.bf16.msra.mxu0 %v225
    %243 = vmatprep.subr.bf16.mxu0 0
    %244 = vmatpush1.bf16.msra.mxu0 %v226
    %245 = vmatprep.subr.bf16.mxu0 0
    %246 = vmatpush1.bf16.msra.mxu0 %v227
    %247 = vmatprep.subr.bf16.mxu0 0
    %248 = vmatpush1.bf16.msra.mxu0 %v228
    %249 = vmatprep.subr.bf16.mxu0 0
    %250 = vmatpush1.bf16.msra.mxu0 %v229
    %251 = vmatprep.subr.bf16.mxu0 0
    %252 = vmatpush1.bf16.msra.mxu0 %v230
    %253 = vmatprep.subr.bf16.mxu0 0
    %254 = vmatpush1.bf16.msra.mxu0 %v231
    %255 = vmatprep.subr.bf16.mxu0 0
    %256 = vmatpush1.bf16.msra.mxu0 %v232
    %257 = vmatprep.subr.bf16.mxu0 0
    %258 = vmatpush1.bf16.msra.mxu0 0
    %259 = vmatprep.subr.bf16.mxu0 0
    %260 = vmatpush1.bf16.msra.mxu0 0
    %261 = vmatprep.subr.bf16.mxu0 0
    %262 = vmatpush1.bf16.msra.mxu0 0
    %263 = vmatprep.subr.bf16.mxu0 0
    %264 = vmatpush1.bf16.msra.mxu0 0
    %265 = vmatprep.subr.bf16.mxu0 0
    %266 = vmatpush1.bf16.msra.mxu0 0
    %267 = vmatprep.subr.bf16.mxu0 0
    %268 = vmatpush1.bf16.msra.mxu0 0
    %269 = vmatprep.subr.bf16.mxu0 0
    %270 = vmatpush1.bf16.msra.mxu0 0
    %271 = vmatprep.subr.bf16.mxu0 0
    %272 = vmatpush1.bf16.msra.mxu0 0
    %273 = vmatprep.mubr.bf16.mxu0 0
    %274 = vmatmul.mubr.bf16.gmra.mrb[0].mxu0 %v177
    %v275 = vpop.f32.mrb[0].mxu0
    %v276 = vadd.f32 %v143, %v275
    %v277 = vpop.f32.mrb[0].mxu0
    %v278 = vpop.f32.mrb[0].mxu0
    %v279 = vadd.f32 %v143, %v278
    %v280 = vpop.f32.mrb[0].mxu0
    %281 = vmatprep.mubr.bf16.mxu0 0
    %282 = vmatmul.mubr.bf16.gmra.mrb[0].mxu0 %v178
    %v283 = vpop.f32.mrb[0].mxu0
    %v284 = vadd.f32 %v143, %v283
    %v285 = vpop.f32.mrb[0].mxu0
    %v286 = vpop.f32.mrb[0].mxu0
    %v287 = vadd.f32 %v143, %v286
    %v288 = vpop.f32.mrb[0].mxu0
    %289 = vmatprep.mubr.bf16.mxu0 0
    %290 = vmatmul.mubr.bf16.gmra.mrb[0].mxu0 %v179
    %v291 = vpop.f32.mrb[0].mxu0
    %v292 = vadd.f32 %v143, %v291
    %v293 = vpop.f32.mrb[0].mxu0
    %v294 = vpop.f32.mrb[0].mxu0
    %v295 = vadd.f32 %v143, %v294
    %v296 = vpop.f32.mrb[0].mxu0
    %297 = vmatprep.mubr.bf16.mxu0 0
    %298 = vmatmul.mubr.bf16.gmra.mrb[0].mxu0 %v180
    %v299 = vpop.f32.mrb[0].mxu0
    %v300 = vadd.f32 %v143, %v299
    %v301 = vpop.f32.mrb[0].mxu0
    %v302 = vpop.f32.mrb[0].mxu0
    %v303 = vadd.f32 %v143, %v302
    %v304 = vpop.f32.mrb[0].mxu0
    %305 = vmatprep.mubr.bf16.mxu0 0
    %306 = vmatmul.mubr.bf16.gmra.mrb[0].mxu0 %v181
    %v307 = vpop.f32.mrb[0].mxu0
    %v308 = vadd.f32 %v143, %v307
    %v309 = vpop.f32.mrb[0].mxu0
    %v310 = vpop.f32.mrb[0].mxu0
    %v311 = vadd.f32 %v143, %v310
    %v312 = vpop.f32.mrb[0].mxu0
    %313 = vmatprep.mubr.bf16.mxu0 0
    %314 = vmatmul.mubr.bf16.gmra.mrb[0].mxu0 %v182
    %v315 = vpop.f32.mrb[0].mxu0
    %v316 = vadd.f32 %v143, %v315
    %v317 = vpop.f32.mrb[0].mxu0
    %v318 = vpop.f32.mrb[0].mxu0
    %v319 = vadd.f32 %v143, %v318
    %v320 = vpop.f32.mrb[0].mxu0
    %321 = vmatprep.mubr.bf16.mxu0 0
    %322 = vmatmul.mubr.bf16.gmra.mrb[0].mxu0 %v183
    %v323 = vpop.f32.mrb[0].mxu0
    %v324 = vadd.f32 %v143, %v323
    %v325 = vpop.f32.mrb[0].mxu0
    %v326 = vpop.f32.mrb[0].mxu0
    %v327 = vadd.f32 %v143, %v326
    %v328 = vpop.f32.mrb[0].mxu0
    %329 = vmatprep.mubr.bf16.mxu0 0
    %330 = vmatmul.mubr.bf16.gmra.mrb[0].mxu0 %v184
    %v331 = vpop.f32.mrb[0].mxu0
    %v332 = vadd.f32 %v143, %v331
    %v333 = vpop.f32.mrb[0].mxu0
    %v334 = vpop.f32.mrb[0].mxu0
    %v335 = vadd.f32 %v143, %v334
    %v336 = vpop.f32.mrb[0].mxu0
    %337 = vdwg.mxu0
    %v338 = vmax.f32 %v276, 0.0
    %v339 = vmax.f32 %v279, 0.0
    %v340 = vmax.f32 %v284, 0.0
    %v341 = vmax.f32 %v287, 0.0
    %v342 = vmax.f32 %v292, 0.0
    %v343 = vmax.f32 %v295, 0.0
    %v344 = vmax.f32 %v300, 0.0
    %v345 = vmax.f32 %v303, 0.0
    %v346 = vmax.f32 %v308, 0.0
    %v347 = vmax.f32 %v311, 0.0
    %v348 = vmax.f32 %v316, 0.0
    %v349 = vmax.f32 %v319, 0.0
    %v350 = vmax.f32 %v324, 0.0
    %v351 = vmax.f32 %v327, 0.0
    %v352 = vmax.f32 %v332, 0.0
    %v353 = vmax.f32 %v335, 0.0
    %v354 = vld [vmem:[#allocation2] sm:$0xff]
    %v355 = vld [vmem:[#allocation2 + $0x8] sm:$0xff]
    %v356 = vld [vmem:[#allocation2 + $0x10] sm:$0xff]
    %v357 = vld [vmem:[#allocation2 + $0x18] sm:$0xff]
    %v358 = vld [vmem:[#allocation2 + $0x20] sm:$0xff]
    %v359 = vld [vmem:[#allocation2 + $0x28] sm:$0xff]
    %v360 = vld [vmem:[#allocation2 + $0x30] sm:$0xff]
    %v361 = vld [vmem:[#allocation2 + $0x38] sm:$0xff]
    %v362 = vld [vmem:[#allocation2 + $0x40] sm:$0xff]
    %v363 = vld [vmem:[#allocation2 + $0x48] sm:$0xff]
    %v364 = vld [vmem:[#allocation2 + $0x50] sm:$0xff]
    %v365 = vld [vmem:[#allocation2 + $0x58] sm:$0xff]
    %v366 = vld [vmem:[#allocation2 + $0x60] sm:$0xff]
    %v367 = vld [vmem:[#allocation2 + $0x68] sm:$0xff]
    %v368 = vld [vmem:[#allocation2 + $0x70] sm:$0xff]
    %v369 = vld [vmem:[#allocation2 + $0x78] sm:$0xff]
    %v370 = vpack.c.bf16 %v339, %v338
    %v371 = vpack.c.bf16 %v341, %v340
    %v372 = vpack.c.bf16 %v343, %v342
    %v373 = vpack.c.bf16 %v345, %v344
    %v374 = vpack.c.bf16 %v347, %v346
    %v375 = vpack.c.bf16 %v349, %v348
    %v376 = vpack.c.bf16 %v351, %v350
    %v377 = vpack.c.bf16 %v353, %v352
    %v378 = vld [vmem:[#allocation9] sm:$0xf]
    %v379 = vld [vmem:[#allocation9 + $0x4] sm:$0xf]
    %v380 = vld [vmem:[#allocation9 + $0x8] sm:$0xf]
    %v381 = vld [vmem:[#allocation9 + $0xc] sm:$0xf]
    %v382 = vld [vmem:[#allocation9 + $0x10] sm:$0xf]
    %v383 = vld [vmem:[#allocation9 + $0x14] sm:$0xf]
    %v384 = vld [vmem:[#allocation9 + $0x18] sm:$0xf]
    %v385 = vld [vmem:[#allocation9 + $0x1c] sm:$0xf]
    %v386 = vld [vmem:[#allocation9 + $0x20] sm:$0xf]
    %v387 = vld [vmem:[#allocation9 + $0x24] sm:$0xf]
    %v388 = vld [vmem:[#allocation9 + $0x28] sm:$0xf]
    %v389 = vld [vmem:[#allocation9 + $0x2c] sm:$0xf]
    %v390 = vld [vmem:[#allocation9 + $0x30] sm:$0xf]
    %v391 = vld [vmem:[#allocation9 + $0x34] sm:$0xf]
    %v392 = vld [vmem:[#allocation9 + $0x38] sm:$0xf]
    %v393 = vld [vmem:[#allocation9 + $0x3c] sm:$0xf]
    %v410 = vunpack.c.l.b16 %v378
    %v411 = vunpack.c.l.b16 %v379
    %v412 = vunpack.c.l.b16 %v380
    %v413 = vunpack.c.l.b16 %v381
    %v414 = vunpack.c.l.b16 %v382
    %v415 = vunpack.c.l.b16 %v383
    %v416 = vunpack.c.l.b16 %v384
    %v417 = vunpack.c.l.b16 %v385
    %v418 = vunpack.c.l.b16 %v386
    %v419 = vunpack.c.l.b16 %v387
    %v420 = vunpack.c.l.b16 %v388
    %v421 = vunpack.c.l.b16 %v389
    %v422 = vunpack.c.l.b16 %v390
    %v423 = vunpack.c.l.b16 %v391
    %v424 = vunpack.c.l.b16 %v392
    %v425 = vunpack.c.l.b16 %v393
    %v426 = vpack.c.b16 %v411, %v410
    %v427 = vpack.c.b16 %v413, %v412
    %v428 = vpack.c.b16 %v415, %v414
    %v429 = vpack.c.b16 %v417, %v416
    %v430 = vpack.c.b16 %v419, %v418
    %v431 = vpack.c.b16 %v421, %v420
    %v432 = vpack.c.b16 %v423, %v422
    %v433 = vpack.c.b16 %v425, %v424
    %442 = vmatprep.subr.bf16.mxu0 0
    %443 = vmatpush1.bf16.msra.mxu0 %v426
    %444 = vmatprep.subr.bf16.mxu0 0
    %445 = vmatpush1.bf16.msra.mxu0 %v427
    %446 = vmatprep.subr.bf16.mxu0 0
    %447 = vmatpush1.bf16.msra.mxu0 %v428
    %448 = vmatprep.subr.bf16.mxu0 0
    %449 = vmatpush1.bf16.msra.mxu0 %v429
    %450 = vmatprep.subr.bf16.mxu0 0
    %451 = vmatpush1.bf16.msra.mxu0 %v430
    %452 = vmatprep.subr.bf16.mxu0 0
    %453 = vmatpush1.bf16.msra.mxu0 %v431
    %454 = vmatprep.subr.bf16.mxu0 0
    %455 = vmatpush1.bf16.msra.mxu0 %v432
    %456 = vmatprep.subr.bf16.mxu0 0
    %457 = vmatpush1.bf16.msra.mxu0 %v433
    %458 = vmatprep.subr.bf16.mxu0 0
    %459 = vmatpush1.bf16.msra.mxu0 0
    %460 = vmatprep.subr.bf16.mxu0 0
    %461 = vmatpush1.bf16.msra.mxu0 0
    %462 = vmatprep.subr.bf16.mxu0 0
    %463 = vmatpush1.bf16.msra.mxu0 0
    %464 = vmatprep.subr.bf16.mxu0 0
    %465 = vmatpush1.bf16.msra.mxu0 0
    %466 = vmatprep.subr.bf16.mxu0 0
    %467 = vmatpush1.bf16.msra.mxu0 0
    %468 = vmatprep.subr.bf16.mxu0 0
    %469 = vmatpush1.bf16.msra.mxu0 0
    %470 = vmatprep.subr.bf16.mxu0 0
    %471 = vmatpush1.bf16.msra.mxu0 0
    %472 = vmatprep.subr.bf16.mxu0 0
    %473 = vmatpush1.bf16.msra.mxu0 0
    %474 = vmatprep.mubr.bf16.mxu0 0
    %475 = vmatmul.mubr.bf16.gmra.mrb[0].mxu0 %v370
    %v476 = vpop.f32.mrb[0].mxu0
    %v477 = vadd.f32 0.0, %v476
    %v478 = vpop.f32.mrb[0].mxu0
    %v479 = vpop.f32.mrb[0].mxu0
    %v480 = vadd.f32 0.0, %v479
    %v481 = vpop.f32.mrb[0].mxu0
    %482 = vmatprep.mubr.bf16.mxu0 0
    %483 = vmatmul.mubr.bf16.gmra.mrb[0].mxu0 %v371
    %v484 = vpop.f32.mrb[0].mxu0
    %v485 = vadd.f32 0.0, %v484
    %v486 = vpop.f32.mrb[0].mxu0
    %v487 = vpop.f32.mrb[0].mxu0
    %v488 = vadd.f32 0.0, %v487
    %v489 = vpop.f32.mrb[0].mxu0
    %490 = vmatprep.mubr.bf16.mxu0 0
    %491 = vmatmul.mubr.bf16.gmra.mrb[0].mxu0 %v372
    %v492 = vpop.f32.mrb[0].mxu0
    %v493 = vadd.f32 0.0, %v492
    %v494 = vpop.f32.mrb[0].mxu0
    %v495 = vpop.f32.mrb[0].mxu0
    %v496 = vadd.f32 0.0, %v495
    %v497 = vpop.f32.mrb[0].mxu0
    %498 = vmatprep.mubr.bf16.mxu0 0
    %499 = vmatmul.mubr.bf16.gmra.mrb[0].mxu0 %v373
    %v500 = vpop.f32.mrb[0].mxu0
    %v501 = vadd.f32 0.0, %v500
    %v502 = vpop.f32.mrb[0].mxu0
    %v503 = vpop.f32.mrb[0].mxu0
    %v504 = vadd.f32 0.0, %v503
    %v505 = vpop.f32.mrb[0].mxu0
    %506 = vmatprep.mubr.bf16.mxu0 0
    %507 = vmatmul.mubr.bf16.gmra.mrb[0].mxu0 %v374
    %v508 = vpop.f32.mrb[0].mxu0
    %v509 = vadd.f32 0.0, %v508
    %v510 = vpop.f32.mrb[0].mxu0
    %v511 = vpop.f32.mrb[0].mxu0
    %v512 = vadd.f32 0.0, %v511
    %v513 = vpop.f32.mrb[0].mxu0
    %514 = vmatprep.mubr.bf16.mxu0 0
    %515 = vmatmul.mubr.bf16.gmra.mrb[0].mxu0 %v375
    %v516 = vpop.f32.mrb[0].mxu0
    %v517 = vadd.f32 0.0, %v516
    %v518 = vpop.f32.mrb[0].mxu0
    %v519 = vpop.f32.mrb[0].mxu0
    %v520 = vadd.f32 0.0, %v519
    %v521 = vpop.f32.mrb[0].mxu0
    %522 = vmatprep.mubr.bf16.mxu0 0
    %523 = vmatmul.mubr.bf16.gmra.mrb[0].mxu0 %v376
    %v524 = vpop.f32.mrb[0].mxu0
    %v525 = vadd.f32 0.0, %v524
    %v526 = vpop.f32.mrb[0].mxu0
    %v527 = vpop.f32.mrb[0].mxu0
    %v528 = vadd.f32 0.0, %v527
    %v529 = vpop.f32.mrb[0].mxu0
    %530 = vmatprep.mubr.bf16.mxu0 0
    %531 = vmatmul.mubr.bf16.gmra.mrb[0].mxu0 %v377
    %v532 = vpop.f32.mrb[0].mxu0
    %v533 = vadd.f32 0.0, %v532
    %v534 = vpop.f32.mrb[0].mxu0
    %v535 = vpop.f32.mrb[0].mxu0
    %v536 = vadd.f32 0.0, %v535
    %v537 = vpop.f32.mrb[0].mxu0
    %538 = vdwg.mxu0
    %v539 = vadd.f32 %v354, %v477
    %v540 = vadd.f32 %v355, %v480
    %v541 = vadd.f32 %v356, %v485
    %v542 = vadd.f32 %v357, %v488
    %v543 = vadd.f32 %v358, %v493
    %v544 = vadd.f32 %v359, %v496
    %v545 = vadd.f32 %v360, %v501
    %v546 = vadd.f32 %v361, %v504
    %v547 = vadd.f32 %v362, %v509
    %v548 = vadd.f32 %v363, %v512
    %v549 = vadd.f32 %v364, %v517
    %v550 = vadd.f32 %v365, %v520
    %v551 = vadd.f32 %v366, %v525
    %v552 = vadd.f32 %v367, %v528
    %v553 = vadd.f32 %v368, %v533
    %v554 = vadd.f32 %v369, %v536
    %555 = vst [vmem:[#allocation2] sm:$0xff] %v539
    %556 = vst [vmem:[#allocation2 + $0x8] sm:$0xff] %v540
    %557 = vst [vmem:[#allocation2 + $0x10] sm:$0xff] %v541
    %558 = vst [vmem:[#allocation2 + $0x18] sm:$0xff] %v542
    %559 = vst [vmem:[#allocation2 + $0x20] sm:$0xff] %v543
    %560 = vst [vmem:[#allocation2 + $0x28] sm:$0xff] %v544
    %561 = vst [vmem:[#allocation2 + $0x30] sm:$0xff] %v545
    %562 = vst [vmem:[#allocation2 + $0x38] sm:$0xff] %v546
    %563 = vst [vmem:[#allocation2 + $0x40] sm:$0xff] %v547
    %564 = vst [vmem:[#allocation2 + $0x48] sm:$0xff] %v548
    %565 = vst [vmem:[#allocation2 + $0x50] sm:$0xff] %v549
    %566 = vst [vmem:[#allocation2 + $0x58] sm:$0xff] %v550
    %567 = vst [vmem:[#allocation2 + $0x60] sm:$0xff] %v551
    %568 = vst [vmem:[#allocation2 + $0x68] sm:$0xff] %v552
    %569 = vst [vmem:[#allocation2 + $0x70] sm:$0xff] %v553
    %570 = vst [vmem:[#allocation2 + $0x78] sm:$0xff] %v554
    // Predicated region
    $region46: #{tpu_custom_call.1} parent=1 // pred_check
      %p571 = pneg %p86
    $region47: #{tpu_custom_call.1} parent=1 // pred_check_branch
      %573 = sbr.rel (%p571) target = $region49
    $region48: #{tpu_custom_call.1} parent=1 // pred_region
      %v574 = vld [vmem:[#allocation2] sm:$0xff]
      %v575 = vld [vmem:[#allocation2 + $0x8] sm:$0xff]
      %v576 = vld [vmem:[#allocation2 + $0x10] sm:$0xff]
      %v577 = vld [vmem:[#allocation2 + $0x18] sm:$0xff]
      %v578 = vld [vmem:[#allocation2 + $0x20] sm:$0xff]
      %v579 = vld [vmem:[#allocation2 + $0x28] sm:$0xff]
      %v580 = vld [vmem:[#allocation2 + $0x30] sm:$0xff]
      %v581 = vld [vmem:[#allocation2 + $0x38] sm:$0xff]
      %v582 = vld [vmem:[#allocation2 + $0x40] sm:$0xff]
      %v583 = vld [vmem:[#allocation2 + $0x48] sm:$0xff]
      %v584 = vld [vmem:[#allocation2 + $0x50] sm:$0xff]
      %v585 = vld [vmem:[#allocation2 + $0x58] sm:$0xff]
      %v586 = vld [vmem:[#allocation2 + $0x60] sm:$0xff]
      %v587 = vld [vmem:[#allocation2 + $0x68] sm:$0xff]
      %v588 = vld [vmem:[#allocation2 + $0x70] sm:$0xff]
      %v589 = vld [vmem:[#allocation2 + $0x78] sm:$0xff]
      %v590 = vld [vmem:[#allocation11] sm:$0x1]
      %v592 = vlaneseq
      %v593 = vshrl.u32 %v592, 7
      %v594 = vsub.s32 0, %v593
      %v595 = vrot.slane %v590, %v594
      %v597 = vadd.f32 %v574, %v595
      %v598 = vadd.f32 %v575, %v595
      %v599 = vadd.f32 %v576, %v595
      %v600 = vadd.f32 %v577, %v595
      %v601 = vadd.f32 %v578, %v595
      %v602 = vadd.f32 %v579, %v595
      %v603 = vadd.f32 %v580, %v595
      %v604 = vadd.f32 %v581, %v595
      %v605 = vadd.f32 %v582, %v595
      %v606 = vadd.f32 %v583, %v595
      %v607 = vadd.f32 %v584, %v595
      %v608 = vadd.f32 %v585, %v595
      %v609 = vadd.f32 %v586, %v595
      %v610 = vadd.f32 %v587, %v595
      %v611 = vadd.f32 %v588, %v595
      %v612 = vadd.f32 %v589, %v595
      %613 = vst [vmem:[#allocation12] sm:$0xff] %v597
      %614 = vst [vmem:[#allocation12 + $0x8] sm:$0xff] %v598
      %615 = vst [vmem:[#allocation12 + $0x10] sm:$0xff] %v599
      %616 = vst [vmem:[#allocation12 + $0x18] sm:$0xff] %v600
      %617 = vst [vmem:[#allocation12 + $0x20] sm:$0xff] %v601
      %618 = vst [vmem:[#allocation12 + $0x28] sm:$0xff] %v602
      %619 = vst [vmem:[#allocation12 + $0x30] sm:$0xff] %v603
      %620 = vst [vmem:[#allocation12 + $0x38] sm:$0xff] %v604
      %621 = vst [vmem:[#allocation12 + $0x40] sm:$0xff] %v605
      %622 = vst [vmem:[#allocation12 + $0x48] sm:$0xff] %v606
      %623 = vst [vmem:[#allocation12 + $0x50] sm:$0xff] %v607
      %624 = vst [vmem:[#allocation12 + $0x58] sm:$0xff] %v608
      %625 = vst [vmem:[#allocation12 + $0x60] sm:$0xff] %v609
      %626 = vst [vmem:[#allocation12 + $0x68] sm:$0xff] %v610
      %627 = vst [vmem:[#allocation12 + $0x70] sm:$0xff] %v611
      %628 = vst [vmem:[#allocation12 + $0x78] sm:$0xff] %v612
    $region49: #{tpu_custom_call.1} parent=1 // pred_fallthru
      _
    // Predicated region
    $region50: #{tpu_custom_call.1} parent=1 // pred_check
      _
    $region51: #{tpu_custom_call.1} parent=1 // pred_check_branch
      %630 = sbr.rel (0) target = $region53
    $region52: #{tpu_custom_call.1} parent=1 // pred_region
      %s632 = ssub.s32 2048, 2048
      %633 = vsyncadd [#allocation5], %s632
      %s634 = sshll.u32 [#allocation12], 4
      %s635 = int_to_ptr.vmem [resolvable:$true] %s634
      %640 = dma.vmem_to_hbm [thread:$0]  %s635, 2048, %s5, [#allocation5], 128, 128, 8
    $region53: #{tpu_custom_call.1} parent=1 // pred_fallthru
      _
    // Predicated region
    $region54: #{tpu_custom_call.1} parent=1 // pred_check
      _
    $region55: #{tpu_custom_call.1} parent=1 // pred_check_branch
      %642 = sbr.rel (0) target = $region57
    $region56: #{tpu_custom_call.1} parent=1 // pred_region
      %643 = dma.done [#allocation5], 2048
    $region57: #{tpu_custom_call.1} parent=1 // pred_fallthru
      _
    %644 = vsyncpa [#allocation4], 1
    %645 = vsyncpa [#allocation7], 1
    %646 = vsyncpa [#allocation10], 1
    %647 = vsyncpa [#allocation5], 1

</llo_original>
